<compile_context>
chip_gen: v5e
topology: v5e:2x2
jax: 0.10.0
libtpu: 0.0.40
codegen_flags: <defaults>
</compile_context>

<pallas_src>
import jax
import jax.numpy as jnp
from jax.experimental import pallas as pl


def _spatial_gcn_kernel(adj_ref, w_ref, x_ref, o_ref):
    # adj_ref: (B*N, B*N)       block-diagonal kron(I_B, sym_norm_adj), resident
    # w_ref:   (T*F_in, T*F_out) block-diagonal kron(I_T, Theta^T), resident
    # x_ref:   (B*N, T*F_in)     x in its original layout, trailing dims merged
    # o_ref:   (B*N, T*F_out)    lane-dense output slab (last dim = 2*128)
    #
    # relu((adj @ x) W^T) == relu(adj @ (x W^T)) exactly (associativity); the
    # packed weight applies W^T per timestep without changing the layout.
    y = jnp.dot(x_ref[...], w_ref[...], preferred_element_type=jnp.float32)   # (B*N, T*F_out)
    z = jnp.dot(adj_ref[...], y, preferred_element_type=jnp.float32)          # (B*N, T*F_out)
    # ReLU on the f32 accumulator (VPU work stays in f32 — v5e has no bf16 VPU).
    o_ref[...] = jnp.maximum(z, 0.0).astype(o_ref.dtype)


def pack_spatial_gcn_params(adj, theta_weight, batch_size, num_timesteps):
    """One-time packing of the module parameters (do NOT call per forward).

    adj:          (N, N)        symmetric-normalized adjacency
    theta_weight: (F_out, F_in) nn.Linear weight layout
    returns (adj_blk, w_blk):
        adj_blk: (B*N, B*N)        = kron(I_B, adj)
        w_blk:   (T*F_in, T*F_out) = kron(I_T, theta_weight^T)
    """
    adj_blk = jnp.kron(jnp.eye(batch_size, dtype=adj.dtype), adj)
    w_blk = jnp.kron(jnp.eye(num_timesteps, dtype=theta_weight.dtype), theta_weight.T)
    return adj_blk, w_blk


def spatial_gcn(x, adj_blk, w_blk):
    """
    x:       (B, N, T, F_in)   float32
    adj_blk: (B*N, B*N)        float32  (pre-packed, see pack_spatial_gcn_params)
    w_blk:   (T*F_in, T*F_out) float32  (pre-packed)
    returns: (B, N, T, F_out)  float32
    """
    B, N, T, F_in = x.shape
    TF_in = T * F_in
    TF_out = w_blk.shape[1]
    F_out = TF_out // T
    M = B * N

    # Guard the "everything resident in VMEM" strategy before shapes grow
    # (v7x default scoped VMEM limit is 32 MiB; leave generous headroom).
    resident_bytes = 4 * (M * M + TF_in * TF_out + M * TF_in + M * TF_out) * 2  # x2 double-buffer
    assert resident_bytes < 16 * 1024 * 1024, (
        "spatial_gcn: resident footprint too large for the single-block kernel; "
        "K-tile adj / switch first matmul to (B*N*T, F_in)@(F_in, F_out)."
    )

    # Free row-major reshape: merge (N, T, F_in) rows into (B*N, T*F_in).
    x_flat = x.reshape(M, TF_in)

    flops = 2 * M * TF_in * TF_out + 2 * M * M * TF_out
    bytes_accessed = 4 * (M * M + TF_in * TF_out + M * TF_in + M * TF_out)

    out = pl.pallas_call(
        _spatial_gcn_kernel,
        out_shape=jax.ShapeDtypeStruct((M, TF_out), x.dtype),
        grid=(1,),  # single step: whole forward in one kernel invocation
        in_specs=[
            pl.BlockSpec((M, M), lambda i: (0, 0)),
            pl.BlockSpec((TF_in, TF_out), lambda i: (0, 0)),
            pl.BlockSpec((M, TF_in), lambda i: (0, 0)),
        ],
        out_specs=pl.BlockSpec((M, TF_out), lambda i: (0, 0)),
        cost_estimate=pl.CostEstimate(
            flops=flops, transcendentals=0, bytes_accessed=bytes_accessed
        ),
    )(adj_blk, w_blk, x_flat)

    # Free reshapes: split leading B*N -> (B, N) and trailing T*F_out -> (T, F_out).
    return out.reshape(B, N, T, F_out)


def _make_sym_norm_adj(key, n):
    # Deterministic synthetic symmetric-normalized adjacency: D^-1/2 (A+I) D^-1/2
    a = (jax.random.uniform(key, (n, n)) > 0.5).astype(jnp.float32)
    a = jnp.maximum(a, a.T)
    a = a + jnp.eye(n, dtype=jnp.float32)
    d = jnp.sum(a, axis=1)
    d_inv_sqrt = 1.0 / jnp.sqrt(d)
    return a * d_inv_sqrt[:, None] * d_inv_sqrt[None, :]


if __name__ == "__main__":
    B, N, T, F_in, F_out = 2, 16, 8, 4, 32

    key = jax.random.PRNGKey(0)
    k_adj, k_w, k_x = jax.random.split(key, 3)

    adj = _make_sym_norm_adj(k_adj, N)
    # nn.Linear(in_channels, out_channels, bias=False) -> weight shape (F_out, F_in)
    theta_weight = jax.random.normal(k_w, (F_out, F_in), dtype=jnp.float32) * 0.1
    x = jax.random.normal(k_x, (B, N, T, F_in), dtype=jnp.float32)

    # Pack parameters once (per parameter set), then run the kernel.
    adj_blk, w_blk = pack_spatial_gcn_params(adj, theta_weight, B, T)
    out = jax.block_until_ready(spatial_gcn(x, adj_blk, w_blk))

    # Pure-JAX reference of the exact PyTorch forward semantics.
    x_bt = jnp.transpose(x, (0, 2, 1, 3)).reshape(B * T, N, F_in)
    ref = jax.nn.relu(jnp.einsum("nm,bmf->bnf", adj, x_bt) @ theta_weight.T)
    ref = jnp.transpose(ref.reshape(B, T, N, F_out), (0, 2, 1, 3))
    assert out.shape == (B, N, T, F_out)
    assert jnp.allclose(out, ref, atol=1e-4, rtol=1e-4)

    print("KERNEL_OK")
</pallas_src>

<mosaic_0001>
module attributes {stable_mosaic.version = 11 : i64} {
  func.func @_spatial_gcn_kernel(%arg0: i32, %arg1: memref<32x32xf32, #tpu.memory_space<vmem>>, %arg2: memref<32x256xf32, #tpu.memory_space<vmem>>, %arg3: memref<32x32xf32, #tpu.memory_space<vmem>>, %arg4: memref<32x256xf32, #tpu.memory_space<vmem>>) attributes {dimension_semantics = [#tpu.dimension_semantics<arbitrary>], iteration_bounds = array<i64: 1>, scalar_prefetch = 0 : i64, scratch_operands = 0 : i64, tpu.core_type = #tpu.core_type<tc>, window_params = [{pipeline_mode = #tpu.pipeline_mode<synchronous>, transform_indices = @transform_0, window_bounds = array<i64: 32, 32>}, {pipeline_mode = #tpu.pipeline_mode<synchronous>, transform_indices = @transform_1, window_bounds = array<i64: 32, 256>}, {pipeline_mode = #tpu.pipeline_mode<synchronous>, transform_indices = @transform_2, window_bounds = array<i64: 32, 32>}, {pipeline_mode = #tpu.pipeline_mode<synchronous>, transform_indices = @transform_3, window_bounds = array<i64: 32, 256>}]} {
    %c0 = arith.constant 0 : index
    %c0_0 = arith.constant 0 : index
    %0 = vector.load %arg3[%c0, %c0_0] : memref<32x32xf32, #tpu.memory_space<vmem>>, vector<32x32xf32>
    %c0_1 = arith.constant 0 : index
    %c0_2 = arith.constant 0 : index
    %1 = vector.load %arg2[%c0_1, %c0_2] : memref<32x256xf32, #tpu.memory_space<vmem>>, vector<32x256xf32>
    %cst = arith.constant dense<0.000000e+00> : vector<32x256xf32>
    %2 = tpu.matmul %0, %1, %cst {dimension_numbers = #tpu.dot_dimension_numbers<[1], [0], [0], [1], [0, 0, 1, 1], [], []>} : vector<32x32xf32>, vector<32x256xf32>, vector<32x256xf32> -> vector<32x256xf32>
    %c0_3 = arith.constant 0 : index
    %c0_4 = arith.constant 0 : index
    %3 = vector.load %arg1[%c0_3, %c0_4] : memref<32x32xf32, #tpu.memory_space<vmem>>, vector<32x32xf32>
    %cst_5 = arith.constant dense<0.000000e+00> : vector<32x256xf32>
    %4 = tpu.matmul %3, %2, %cst_5 {dimension_numbers = #tpu.dot_dimension_numbers<[1], [0], [0], [1], [0, 0, 1, 1], [], []>} : vector<32x32xf32>, vector<32x256xf32>, vector<32x256xf32> -> vector<32x256xf32>
    %cst_6 = arith.constant 0.000000e+00 : f32
    %5 = vector.broadcast %cst_6 : f32 to vector<32x256xf32>
    %6 = arith.maximumf %4, %5 : vector<32x256xf32>
    %c0_7 = arith.constant 0 : index
    %c0_8 = arith.constant 0 : index
    %7 = vector.load %arg4[%c0_7, %c0_8] : memref<32x256xf32, #tpu.memory_space<vmem>>, vector<32x256xf32>
    tpu.vector_store %arg4[%c0_7, %c0_8], %6 {strides = array<i32>} : memref<32x256xf32, #tpu.memory_space<vmem>>, vector<32x256xf32>,
    return
  }
  func.func @transform_0(%arg0: i32) -> (i32, i32) {
    %c0_i32 = arith.constant 0 : i32
    %c0_i32_0 = arith.constant 0 : i32
    %c0_i32_1 = arith.constant 0 : i32
    return %c0_i32, %c0_i32_0 : i32, i32
  }
  func.func @transform_1(%arg0: i32) -> (i32, i32) {
    %c0_i32 = arith.constant 0 : i32
    %c0_i32_0 = arith.constant 0 : i32
    %c0_i32_1 = arith.constant 0 : i32
    return %c0_i32, %c0_i32_0 : i32, i32
  }
  func.func @transform_2(%arg0: i32) -> (i32, i32) {
    %c0_i32 = arith.constant 0 : i32
    %c0_i32_0 = arith.constant 0 : i32
    %c0_i32_1 = arith.constant 0 : i32
    return %c0_i32, %c0_i32_0 : i32, i32
  }
  func.func @transform_3(%arg0: i32) -> (i32, i32) {
    %c0_i32 = arith.constant 0 : i32
    %c0_i32_0 = arith.constant 0 : i32
    %c0_i32_1 = arith.constant 0 : i32
    return %c0_i32, %c0_i32_0 : i32, i32
  }
}

</mosaic_0001>

<llo_original>
// kernel: tpu_custom_call.1
$region0: #{tpu_custom_call.1}
  #allocation0 [shape = 'u32[]', space=smem, size = 0x4, offset = 0x4, fixed_abs, tag = 'smem constant byte address 0x4 - core index']
  #allocation1 [shape = 'u32[72,128]{1,0:T(1,128)}', space=vmem, size = 0x9000, scoped, tag = 'internal scratch']
  %s0 = inlined_call_operand.hbm [shape: f32[32,32], index: 0, kind: input, shape index: {}]
  %s1 = inlined_call_operand.hbm [shape: f32[32,256], index: 1, kind: input, shape index: {}]
  %s2 = inlined_call_operand.hbm [shape: f32[32,32], index: 2, kind: input, shape index: {}]
  %s3 = inlined_call_operand.hbm [shape: f32[32,256], index: 3, kind: output, shape index: {}]
  %s4 = sld [smem:[#allocation0]]
  $region34: #{tpu_custom_call.1} parent=0
    _
  %s6 = ssub.s32 1, %s4
  %s7 = scalar_select 0, %s6, %s4
  $region1: #{tpu_custom_call.1} parent=0
    #allocation2 [shape = 'u8[16384]{0}', space=vmem, size = 0x4000, scoped, tag = 'input window, operand 0, single buffered']
    #allocation3 [shape = 's32[1]{0}', space=sflag, size = 0x4, scoped, tag = 'scoped memory for tpu_custom_call.1']
    #allocation4 [shape = 's32[1]{0}', space=sflag, size = 0x4, scoped, tag = 'scoped memory for tpu_custom_call.1']
    #allocation5 [shape = 'u8[32768]{0}', space=vmem, size = 0x8000, scoped, tag = 'input window, operand 1, single buffered']
    #allocation6 [shape = 's32[1]{0}', space=sflag, size = 0x4, scoped, tag = 'scoped memory for tpu_custom_call.1']
    #allocation7 [shape = 'u8[16384]{0}', space=vmem, size = 0x4000, scoped, tag = 'input window, operand 2, single buffered']
    #allocation8 [shape = 'u8[32768]{0}', space=vmem, size = 0x8000, scoped, tag = 'output window, operand 0, single buffered']
    %8 = vsyncpa [#allocation3], 0
    %9 = vsyncpa [#allocation6], 0
    %10 = vsyncpa [#allocation4], 0
    // Predicated region
    $region2: #{tpu_custom_call.1} parent=1 // pred_check
      _
    $region3: #{tpu_custom_call.1} parent=1 // pred_check_branch
      %12 = sbr.rel (0) target = $region5
    $region4: #{tpu_custom_call.1} parent=1 // pred_region
      %14 = vsyncadd [#allocation3], 0
      %s15 = sshll.u32 %s0, 4
      %s16 = int_to_ptr.hbm [resolvable:$true] %s15
      %s17 = sshll.u32 [#allocation2], 4
      %s18 = int_to_ptr.vmem [resolvable:$true] %s17
      %23 = dma.hbm_to_vmem [thread:$0]  %s16, 512, %s18, [#allocation3], 128, 128, 8
    $region5: #{tpu_custom_call.1} parent=1 // pred_fallthru
      _
    // Predicated region
    $region6: #{tpu_custom_call.1} parent=1 // pred_check
      _
    $region7: #{tpu_custom_call.1} parent=1 // pred_check_branch
      %25 = sbr.rel (0) target = $region9
    $region8: #{tpu_custom_call.1} parent=1 // pred_region
      %27 = vsyncadd [#allocation6], 0
      %s28 = sshll.u32 %s1, 4
      %s29 = int_to_ptr.hbm [resolvable:$true] %s28
      %s30 = sshll.u32 [#allocation5], 4
      %s31 = int_to_ptr.vmem [resolvable:$true] %s30
      %36 = dma.hbm_to_vmem [thread:$0]  %s29, 1024, %s31, [#allocation6], 256, 256, 16
    $region9: #{tpu_custom_call.1} parent=1 // pred_fallthru
      _
    // Predicated region
    $region10: #{tpu_custom_call.1} parent=1 // pred_check
      _
    $region11: #{tpu_custom_call.1} parent=1 // pred_check_branch
      %38 = sbr.rel (0) target = $region13
    $region12: #{tpu_custom_call.1} parent=1 // pred_region
      %40 = vsyncadd [#allocation6], 0
      %s41 = sshll.u32 %s2, 4
      %s42 = int_to_ptr.hbm [resolvable:$true] %s41
      %s43 = sshll.u32 [#allocation7], 4
      %s44 = int_to_ptr.vmem [resolvable:$true] %s43
      %49 = dma.hbm_to_vmem [thread:$0]  %s42, 512, %s44, [#allocation6], 128, 128, 8
    $region13: #{tpu_custom_call.1} parent=1 // pred_fallthru
      _
    // Predicated region
    $region14: #{tpu_custom_call.1} parent=1 // pred_check
      _
    $region15: #{tpu_custom_call.1} parent=1 // pred_check_branch
      %51 = sbr.rel (0) target = $region17
    $region16: #{tpu_custom_call.1} parent=1 // pred_region
      %53 = dma.done [#allocation3], 512
    $region17: #{tpu_custom_call.1} parent=1 // pred_fallthru
      _
    // Predicated region
    $region18: #{tpu_custom_call.1} parent=1 // pred_check
      _
    $region19: #{tpu_custom_call.1} parent=1 // pred_check_branch
      %55 = sbr.rel (0) target = $region21
    $region20: #{tpu_custom_call.1} parent=1 // pred_region
      %57 = dma.done [#allocation6], 1024
    $region21: #{tpu_custom_call.1} parent=1 // pred_fallthru
      _
    // Predicated region
    $region22: #{tpu_custom_call.1} parent=1 // pred_check
      _
    $region23: #{tpu_custom_call.1} parent=1 // pred_check_branch
      %59 = sbr.rel (0) target = $region25
    $region24: #{tpu_custom_call.1} parent=1 // pred_region
      %61 = dma.done [#allocation6], 512
    $region25: #{tpu_custom_call.1} parent=1 // pred_fallthru
      _
    %v62 = vld [vmem:[#allocation7] sm:$0xff]
    %v63 = vld [vmem:[#allocation7 + $0x8] sm:$0xff]
    %v64 = vld [vmem:[#allocation7 + $0x10] sm:$0xff]
    %v65 = vld [vmem:[#allocation7 + $0x18] sm:$0xff]
    %v66 = vld [vmem:[#allocation5] sm:$0xff]
    %v67 = vld [vmem:[#allocation5 + $0x8] sm:$0xff]
    %v68 = vld [vmem:[#allocation5 + $0x10] sm:$0xff]
    %v69 = vld [vmem:[#allocation5 + $0x18] sm:$0xff]
    %v70 = vld [vmem:[#allocation5 + $0x20] sm:$0xff]
    %v71 = vld [vmem:[#allocation5 + $0x28] sm:$0xff]
    %v72 = vld [vmem:[#allocation5 + $0x30] sm:$0xff]
    %v73 = vld [vmem:[#allocation5 + $0x38] sm:$0xff]
    %vm74 = vcmask 261120
    %v76 = vsel %vm74, %v62, 0
    %v79 = vsel %vm74, %v63, 0
    %v82 = vsel %vm74, %v64, 0
    %v85 = vsel %vm74, %v65, 0
    %87 = vmatpush.msra.mxu0 0.0
    %88 = vmatpush.msra.mxu0 0.0
    %89 = vmatpush.msra.mxu0 0.0
    %90 = vmatpush.msra.mxu0 0.0
    %91 = vmatpush.msra.mxu0 0.0
    %92 = vmatpush.msra.mxu0 0.0
    %93 = vmatpush.msra.mxu0 0.0
    %94 = vmatpush.msra.mxu0 0.0
    %95 = vmatpush.msra.mxu0 0.0
    %96 = vmatpush.msra.mxu0 0.0
    %97 = vmatpush.msra.mxu0 0.0
    %98 = vmatpush.msra.mxu0 0.0
    %99 = vmatpush.msra.mxu0 %v72
    %100 = vmatpush.msra.mxu0 %v70
    %101 = vmatpush.msra.mxu0 %v68
    %102 = vmatpush.msra.mxu0 %v66
    %103 = vmatmul.f32.gmra.mxu0 %v76
    %v104 = vpop.f32.mrf.mxu0
    %v105 = vadd.f32 0.0, %v104
    %106 = vmatmul.f32.gmra.mxu0 %v79
    %v107 = vpop.f32.mrf.mxu0
    %v108 = vadd.f32 0.0, %v107
    %109 = vmatmul.f32.gmra.mxu0 %v82
    %v110 = vpop.f32.mrf.mxu0
    %v111 = vadd.f32 0.0, %v110
    %112 = vmatmul.f32.gmra.mxu0 %v85
    %v113 = vpop.f32.mrf.mxu0
    %v114 = vadd.f32 0.0, %v113
    %115 = vdwg.mxu0
    %116 = vmatpush.msra.mxu0 0.0
    %117 = vmatpush.msra.mxu0 0.0
    %118 = vmatpush.msra.mxu0 0.0
    %119 = vmatpush.msra.mxu0 0.0
    %120 = vmatpush.msra.mxu0 0.0
    %121 = vmatpush.msra.mxu0 0.0
    %122 = vmatpush.msra.mxu0 0.0
    %123 = vmatpush.msra.mxu0 0.0
    %124 = vmatpush.msra.mxu0 0.0
    %125 = vmatpush.msra.mxu0 0.0
    %126 = vmatpush.msra.mxu0 0.0
    %127 = vmatpush.msra.mxu0 0.0
    %128 = vmatpush.msra.mxu0 %v73
    %129 = vmatpush.msra.mxu0 %v71
    %130 = vmatpush.msra.mxu0 %v69
    %131 = vmatpush.msra.mxu0 %v67
    %132 = vmatmul.f32.gmra.mxu0 %v76
    %v133 = vpop.f32.mrf.mxu0
    %v134 = vadd.f32 0.0, %v133
    %135 = vmatmul.f32.gmra.mxu0 %v79
    %v136 = vpop.f32.mrf.mxu0
    %v137 = vadd.f32 0.0, %v136
    %138 = vmatmul.f32.gmra.mxu0 %v82
    %v139 = vpop.f32.mrf.mxu0
    %v140 = vadd.f32 0.0, %v139
    %141 = vmatmul.f32.gmra.mxu0 %v85
    %v142 = vpop.f32.mrf.mxu0
    %v143 = vadd.f32 0.0, %v142
    %144 = vdwg.mxu0
    %v145 = vld [vmem:[#allocation2] sm:$0xff]
    %v146 = vld [vmem:[#allocation2 + $0x8] sm:$0xff]
    %v147 = vld [vmem:[#allocation2 + $0x10] sm:$0xff]
    %v148 = vld [vmem:[#allocation2 + $0x18] sm:$0xff]
    %v150 = vsel %vm74, %v145, 0
    %v153 = vsel %vm74, %v146, 0
    %v156 = vsel %vm74, %v147, 0
    %v159 = vsel %vm74, %v148, 0
    %161 = vmatpush.msra.mxu0 0.0
    %162 = vmatpush.msra.mxu0 0.0
    %163 = vmatpush.msra.mxu0 0.0
    %164 = vmatpush.msra.mxu0 0.0
    %165 = vmatpush.msra.mxu0 0.0
    %166 = vmatpush.msra.mxu0 0.0
    %167 = vmatpush.msra.mxu0 0.0
    %168 = vmatpush.msra.mxu0 0.0
    %169 = vmatpush.msra.mxu0 0.0
    %170 = vmatpush.msra.mxu0 0.0
    %171 = vmatpush.msra.mxu0 0.0
    %172 = vmatpush.msra.mxu0 0.0
    %173 = vmatpush.msra.mxu0 %v114
    %174 = vmatpush.msra.mxu0 %v111
    %175 = vmatpush.msra.mxu0 %v108
    %176 = vmatpush.msra.mxu0 %v105
    %177 = vmatmul.f32.gmra.mxu0 %v150
    %v178 = vpop.f32.mrf.mxu0
    %v179 = vadd.f32 0.0, %v178
    %180 = vmatmul.f32.gmra.mxu0 %v153
    %v181 = vpop.f32.mrf.mxu0
    %v182 = vadd.f32 0.0, %v181
    %183 = vmatmul.f32.gmra.mxu0 %v156
    %v184 = vpop.f32.mrf.mxu0
    %v185 = vadd.f32 0.0, %v184
    %186 = vmatmul.f32.gmra.mxu0 %v159
    %v187 = vpop.f32.mrf.mxu0
    %v188 = vadd.f32 0.0, %v187
    %189 = vdwg.mxu0
    %190 = vmatpush.msra.mxu0 0.0
    %191 = vmatpush.msra.mxu0 0.0
    %192 = vmatpush.msra.mxu0 0.0
    %193 = vmatpush.msra.mxu0 0.0
    %194 = vmatpush.msra.mxu0 0.0
    %195 = vmatpush.msra.mxu0 0.0
    %196 = vmatpush.msra.mxu0 0.0
    %197 = vmatpush.msra.mxu0 0.0
    %198 = vmatpush.msra.mxu0 0.0
    %199 = vmatpush.msra.mxu0 0.0
    %200 = vmatpush.msra.mxu0 0.0
    %201 = vmatpush.msra.mxu0 0.0
    %202 = vmatpush.msra.mxu0 %v143
    %203 = vmatpush.msra.mxu0 %v140
    %204 = vmatpush.msra.mxu0 %v137
    %205 = vmatpush.msra.mxu0 %v134
    %206 = vmatmul.f32.gmra.mxu0 %v150
    %v207 = vpop.f32.mrf.mxu0
    %v208 = vadd.f32 0.0, %v207
    %209 = vmatmul.f32.gmra.mxu0 %v153
    %v210 = vpop.f32.mrf.mxu0
    %v211 = vadd.f32 0.0, %v210
    %212 = vmatmul.f32.gmra.mxu0 %v156
    %v213 = vpop.f32.mrf.mxu0
    %v214 = vadd.f32 0.0, %v213
    %215 = vmatmul.f32.gmra.mxu0 %v159
    %v216 = vpop.f32.mrf.mxu0
    %v217 = vadd.f32 0.0, %v216
    %218 = vdwg.mxu0
    %v219 = vmax.f32 %v179, 0.0
    %v220 = vmax.f32 %v208, 0.0
    %v221 = vmax.f32 %v182, 0.0
    %v222 = vmax.f32 %v211, 0.0
    %v223 = vmax.f32 %v185, 0.0
    %v224 = vmax.f32 %v214, 0.0
    %v225 = vmax.f32 %v188, 0.0
    %v226 = vmax.f32 %v217, 0.0
    %227 = vst [vmem:[#allocation8] sm:$0xff] %v219
    %228 = vst [vmem:[#allocation8 + $0x8] sm:$0xff] %v220
    %229 = vst [vmem:[#allocation8 + $0x10] sm:$0xff] %v221
    %230 = vst [vmem:[#allocation8 + $0x18] sm:$0xff] %v222
    %231 = vst [vmem:[#allocation8 + $0x20] sm:$0xff] %v223
    %232 = vst [vmem:[#allocation8 + $0x28] sm:$0xff] %v224
    %233 = vst [vmem:[#allocation8 + $0x30] sm:$0xff] %v225
    %234 = vst [vmem:[#allocation8 + $0x38] sm:$0xff] %v226
    // Predicated region
    $region26: #{tpu_custom_call.1} parent=1 // pred_check
      _
    $region27: #{tpu_custom_call.1} parent=1 // pred_check_branch
      %236 = sbr.rel (0) target = $region29
    $region28: #{tpu_custom_call.1} parent=1 // pred_region
      %238 = vsyncadd [#allocation4], 0
      %s239 = sshll.u32 [#allocation8], 4
      %s240 = int_to_ptr.vmem [resolvable:$true] %s239
      %s241 = sshll.u32 %s3, 4
      %s242 = int_to_ptr.hbm [resolvable:$true] %s241
      %247 = dma.vmem_to_hbm [thread:$0]  %s240, 1024, %s242, [#allocation4], 256, 256, 16
    $region29: #{tpu_custom_call.1} parent=1 // pred_fallthru
      _
    // Predicated region
    $region30: #{tpu_custom_call.1} parent=1 // pred_check
      _
    $region31: #{tpu_custom_call.1} parent=1 // pred_check_branch
      %249 = sbr.rel (0) target = $region33
    $region32: #{tpu_custom_call.1} parent=1 // pred_region
      %251 = dma.done [#allocation4], 1024
    $region33: #{tpu_custom_call.1} parent=1 // pred_fallthru
      _
    %252 = vsyncpa [#allocation3], 1
    %253 = vsyncpa [#allocation6], 1
    %254 = vsyncpa [#allocation4], 1

</llo_original>
